<compile_context>
chip_gen: v7x
topology: tpu7x:2x2x1
jax: 0.10.0
libtpu: 0.0.40
codegen_flags: <defaults>
</compile_context>

<pallas_src>
import functools

import jax
import jax.numpy as jnp
from jax import lax
from jax.experimental import pallas as pl
from jax.experimental.pallas import tpu as pltpu

R_CANDIDATES = 10  # the module always draws 10 random (x, y) candidates per slot


def _default_exp_dtype():
    """bf16 exp/MXU path on v6e/v7x, f32 everywhere else (v5e has no bf16 EUP)."""
    try:
        kind = jax.devices()[0].device_kind.lower()
    except Exception:
        return jnp.float32
    if ("v6" in kind) or ("v7" in kind):
        return jnp.bfloat16
    return jnp.float32


# ---------------------------------------------------------------------------
# Fused kernel: separable Gaus2D x error (MXU) -> per-object argmax/gather,
# plus the gestalt sigmoid sampling.  One invocation handles the whole batch.
# ---------------------------------------------------------------------------
def _fused_kernel(err_ref, cxy_ref, grand_ref, gmean_ref, gstd_ref,
                  xy_ref, gest_ref, *, num_objects, exp_dtype):
    f32 = jnp.float32
    B, h, w = err_ref.shape
    C = cxy_ref.shape[2]
    O = num_objects
    R = C // O

    # Gaus2D with std=0: std_x = 1/size[0], std_y = 1/size[1]
    #   exponent = (gx - x)^2 * h^2/2 + (gy - y)^2 * w^2/2
    kx = float(h) * float(h) * 0.5
    ky = float(w) * float(w) * 0.5
    sx = 2.0 / (h - 1) if h > 1 else 0.0
    sy = 2.0 / (w - 1) if w > 1 else 0.0

    # 1-D grid coordinates, built in-register (no HBM inputs for the grids).
    gx = lax.broadcasted_iota(jnp.int32, (1, h, 1), 1).astype(f32) * sx - 1.0
    gy = lax.broadcasted_iota(jnp.int32, (1, w, 1), 1).astype(f32) * sy - 1.0

    cx = cxy_ref[:, 0:1, :]                              # (B, 1, C) raw candidates
    cy = cxy_ref[:, 1:2, :]
    x = jnp.clip(cx, -1.0, 1.0)
    y = jnp.clip(cy, -1.0, 1.0)

    # Separable exp tables: C*(h+w) transcendentals instead of C*h*w.
    dx = gx - x                                          # (B, h, C)
    dy = gy - y                                          # (B, w, C)
    ex_t = jnp.exp(((-kx) * dx * dx).astype(exp_dtype))  # (B, h, C)  == Ex^T
    ey = jnp.exp(((-ky) * dy * dy).astype(exp_dtype))    # (B, w, C)

    # MXU: T[b,i,c] = sum_j err[b,i,j] * Ey[b,j,c]   (f32 accumulation)
    err = err_ref[...].astype(exp_dtype)                 # (B, h, w)
    t = jnp.einsum('bhw,bwc->bhc', err, ey,
                   preferred_element_type=jnp.float32)   # (B, h, C)

    # scores re[b,c] = sum_i Ex[b,i,c] * T[b,i,c]  -> lane-dense (B, 1, C)
    re = jnp.sum(ex_t.astype(f32) * t, axis=1, keepdims=True)

    # Fused per-object argmax over the R candidates (first max, like torch) + gather.
    col = lax.broadcasted_iota(jnp.int32, (1, O, C), 2)
    row = lax.broadcasted_iota(jnp.int32, (1, O, C), 1)
    in_group = (col >= row * R) & (col < (row + 1) * R)  # candidate c belongs to object o
    masked = jnp.where(in_group, re, -jnp.inf)           # (B, O, C)
    best = jnp.max(masked, axis=2, keepdims=True)        # (B, O, 1)
    first = jnp.min(jnp.where(masked == best, col, C),
                    axis=2, keepdims=True)               # (B, O, 1) first-max index
    onehot = (col == first).astype(f32)                  # (B, O, C)
    xy_ref[0] = jnp.sum(onehot * cx, axis=2)             # (B, O) selected x
    xy_ref[1] = jnp.sum(onehot * cy, axis=2)             # (B, O) selected y

    # gestalt_new = sigmoid(randn * std + mean), one dense 128-lane row per batch.
    z = grand_ref[...] * gstd_ref[...] + gmean_ref[...]  # (B, O*G)
    gest_ref[...] = 1.0 / (1.0 + jnp.exp(-z))


def fused_select_and_gestalt(error_hw, cxy, grand, gmean_t, gstd_t, *,
                             num_objects, compute_dtype=None):
    """error_hw:(B,h,w)  cxy:(B,2,C)  grand:(B,O*G)  gmean_t/gstd_t:(1,O*G).

    Returns (xy_sel (2,B,O), gestalt_new (B,O*G))."""
    B, h, w = error_hw.shape
    _, _, C = cxy.shape
    OG = grand.shape[1]
    O = num_objects
    if compute_dtype is None:
        compute_dtype = _default_exp_dtype()

    kernel = functools.partial(_fused_kernel, num_objects=O,
                               exp_dtype=compute_dtype)

    return pl.pallas_call(
        kernel,
        out_shape=(
            jax.ShapeDtypeStruct((2, B, O), jnp.float32),   # selected x / y
            jax.ShapeDtypeStruct((B, OG), jnp.float32),     # gestalt_new (lane-dense)
        ),
        grid_spec=pltpu.PrefetchScalarGridSpec(
            num_scalar_prefetch=0,
            grid=(1,),   # whole batch in one step: no per-batch grid-step overhead
            in_specs=[
                pl.BlockSpec((B, h, w), lambda i: (0, 0, 0)),   # error map
                pl.BlockSpec((B, 2, C), lambda i: (0, 0, 0)),   # candidates (lane-dense)
                pl.BlockSpec((B, OG),   lambda i: (0, 0)),      # gestalt randn
                pl.BlockSpec((1, OG),   lambda i: (0, 0)),      # gestalt mean (tiled)
                pl.BlockSpec((1, OG),   lambda i: (0, 0)),      # gestalt std (tiled)
            ],
            out_specs=[
                pl.BlockSpec((2, B, O), lambda i: (0, 0, 0)),
                pl.BlockSpec((B, OG),   lambda i: (0, 0)),
            ],
        ),
        compiler_params=pltpu.CompilerParams(
            dimension_semantics=("arbitrary",)),
    )(error_hw, cxy, grand, gmean_t, gstd_t)


# ---------------------------------------------------------------------------
# Pure-jnp reference of the fused kernel (for the in-script correctness check);
# written directly from the torch Gaus2D / argmax / gather code.
# ---------------------------------------------------------------------------
def _reference_select(error_hw, cxy, grand, gmean_t, gstd_t, *, num_objects):
    B, h, w = error_hw.shape
    C = cxy.shape[2]
    O = num_objects
    R = C // O
    kx = h * h / 2.0
    ky = w * w / 2.0
    gx = (jnp.arange(h, dtype=jnp.float32) / (h - 1)) * 2.0 - 1.0   # along size[0]
    gy = (jnp.arange(w, dtype=jnp.float32) / (w - 1)) * 2.0 - 1.0   # along size[1]
    x = jnp.clip(cxy[:, 0, :], -1.0, 1.0)[:, :, None, None]          # (B, C, 1, 1)
    y = jnp.clip(cxy[:, 1, :], -1.0, 1.0)[:, :, None, None]
    g = jnp.exp(-(kx * (gx[None, None, :, None] - x) ** 2
                  + ky * (gy[None, None, None, :] - y) ** 2))        # (B, C, h, w)
    re = jnp.sum(g * error_hw[:, None, :, :], axis=(2, 3))           # (B, C)
    best = jnp.argmax(re.reshape(B, O, R), axis=2)                   # (B, O)
    cx = cxy[:, 0, :].reshape(B, O, R)
    cy = cxy[:, 1, :].reshape(B, O, R)
    x_sel = jnp.take_along_axis(cx, best[..., None], axis=2)[..., 0]
    y_sel = jnp.take_along_axis(cy, best[..., None], axis=2)[..., 0]
    xy_sel = jnp.stack([x_sel, y_sel], axis=0)                       # (2, B, O)
    gest = 1.0 / (1.0 + jnp.exp(-(grand * gstd_t + gmean_t)))
    return xy_sel, gest


# ---------------------------------------------------------------------------
# Full InitialLatentStates.forward
# ---------------------------------------------------------------------------
def initial_latent_states(error, *, key, num_objects, gestalt_size, size,
                          level, gestalt_mean, gestalt_std, std_param,
                          mask=None, position=None, gestalt=None,
                          priority=None, last_mask=None, threshold=0.5,
                          compute_dtype=None):
    """error: (B, 1, h, w) at the current level's resolution.

    Returns (position_shared (B, 3*O), gestalt_shared (B, G*O),
             priority_shared (B, O)) -- same as the torch module.
    """
    B = error.shape[0]
    O = num_objects
    G = gestalt_size
    R = R_CANDIDATES
    C = O * R
    OG = O * G

    level_sizes = ((size[0] // 16, size[1] // 16),
                   (size[0] // 4, size[1] // 4),
                   size)
    h, w = level_sizes[level]
    assert error.shape == (B, 1, h, w), error.shape

    # ---- occupancy mask (stateful last_mask handled functionally) --------
    if last_mask is None:
        last_mask = jnp.zeros((B * O, 1), jnp.float32)
    if mask is not None:
        m = jnp.max(mask[:, :-1], axis=(2, 3)).reshape(B * O, 1)
        last_mask = jnp.maximum(last_mask, m)
    occupied = (last_mask > threshold).astype(jnp.float32)     # (B*O, 1)

    # ---- random draws (jax.random in place of torch RNG) ------------------
    k_gest, k_xy = jax.random.split(key)
    grand = jax.random.normal(k_gest, (B, OG), dtype=jnp.float32)
    cxy = jax.random.uniform(k_xy, (B, 2, C), dtype=jnp.float32,
                             minval=-1.0, maxval=1.0)          # std_new == 0

    gmean_t = jnp.tile(gestalt_mean.reshape(1, G).astype(jnp.float32), (1, O))
    gstd_t = jnp.tile(gestalt_std.reshape(1, G).astype(jnp.float32), (1, O))

    error_hw = error.reshape(B, h, w).astype(jnp.float32)

    # ---- fused Pallas kernel ----------------------------------------------
    xy_sel, gestalt_new = fused_select_and_gestalt(
        error_hw, cxy, grand, gmean_t, gstd_t,
        num_objects=O, compute_dtype=compute_dtype)

    x_sel = xy_sel[0].reshape(B * O, 1)
    y_sel = xy_sel[1].reshape(B * O, 1)

    # ---- position / gestalt / priority (blend with occupancy if provided) -
    std = jnp.broadcast_to(std_param.reshape(1, 1).astype(jnp.float32),
                           (B * O, 1))
    pos_new = jnp.concatenate([x_sel, y_sel, std], axis=1)      # (B*O, 3)
    if position is None:
        position_out = pos_new
    else:
        position_out = (position.reshape(B * O, 3) * occupied
                        + pos_new * (1.0 - occupied))

    gestalt_new_flat = gestalt_new.reshape(B * O, G)            # free metadata reshape
    if gestalt is None:
        gestalt_out = gestalt_new_flat
    else:
        gestalt_out = (gestalt.reshape(B * O, G) * occupied
                       + gestalt_new_flat * (1.0 - occupied))

    prio_base = jnp.tile(jnp.arange(O, dtype=jnp.float32) * 25.0,
                         (B,)).reshape(B * O, 1)
    if priority is None:
        priority_out = prio_base
    else:
        priority_out = (priority.reshape(B * O, 1) * occupied
                        + prio_base * (1.0 - occupied))

    # to_shared: '(b o) c -> b (o c)' is a free metadata reshape.
    return (position_out.reshape(B, O * 3),
            gestalt_out.reshape(B, O * G),
            priority_out.reshape(B, O))


if __name__ == "__main__":
    num_objects = 4
    gestalt_size = 32
    batch = 2
    R = R_CANDIDATES
    C = num_objects * R
    OG = num_objects * gestalt_size

    root = jax.random.PRNGKey(0)
    k_err, k_fwd, k_chk, k_msk = jax.random.split(root, 4)

    # ---- strict correctness check (f32 path) on a NON-SQUARE grid ---------
    # (validates the grid_x-along-size[0] / grid_y-along-size[1] convention)
    h, w = 16, 8
    ka, kb, kc = jax.random.split(k_chk, 3)
    err_t = jax.random.uniform(ka, (batch, h, w), dtype=jnp.float32)
    cxy_t = jax.random.uniform(kb, (batch, 2, C), dtype=jnp.float32,
                               minval=-1.0, maxval=1.0)
    grand_t = jax.random.normal(kc, (batch, OG), dtype=jnp.float32)
    gmean_t = jnp.tile(jnp.full((1, gestalt_size), 0.1, jnp.float32), (1, num_objects))
    gstd_t = jnp.tile(jnp.full((1, gestalt_size), 0.9, jnp.float32), (1, num_objects))

    xy_k, ge_k = fused_select_and_gestalt(
        err_t, cxy_t, grand_t, gmean_t, gstd_t,
        num_objects=num_objects, compute_dtype=jnp.float32)
    xy_r, ge_r = _reference_select(
        err_t, cxy_t, grand_t, gmean_t, gstd_t, num_objects=num_objects)
    jax.block_until_ready((xy_k, ge_k))
    assert xy_k.shape == (2, batch, num_objects), xy_k.shape
    assert jnp.allclose(xy_k, xy_r, atol=1e-5), "selected xy mismatch"
    assert jnp.allclose(ge_k, ge_r, rtol=1e-5, atol=1e-6), "gestalt mismatch"

    # ---- full forward pass (default compute dtype: bf16 on v6e/v7x) -------
    size = (64, 64)
    level = 1                               # -> (16, 16)
    hh, ww = size[0] // 4, size[1] // 4
    error = jax.random.uniform(k_err, (batch, 1, hh, ww), dtype=jnp.float32)
    gestalt_mean = jnp.zeros((1, gestalt_size), jnp.float32)   # nn.Parameter init
    gestalt_std = jnp.ones((1, gestalt_size), jnp.float32)     # nn.Parameter init
    std_param = jnp.zeros((1,), jnp.float32)                   # nn.Parameter init

    pos_s, ges_s, pri_s = initial_latent_states(
        error, key=k_fwd, num_objects=num_objects, gestalt_size=gestalt_size,
        size=size, level=level, gestalt_mean=gestalt_mean,
        gestalt_std=gestalt_std, std_param=std_param)
    jax.block_until_ready((pos_s, ges_s, pri_s))

    assert pos_s.shape == (batch, num_objects * 3), pos_s.shape
    assert ges_s.shape == (batch, num_objects * gestalt_size), ges_s.shape
    assert pri_s.shape == (batch, num_objects), pri_s.shape
    assert bool(jnp.all(jnp.abs(pos_s) <= 1.0))          # x, y in [-1,1], std = 0
    assert bool(jnp.all((ges_s > 0.0) & (ges_s < 1.0)))  # sigmoid output

    # ---- exercise the occupancy-blend path ---------------------------------
    mask_in = jax.random.uniform(k_msk, (batch, num_objects + 1, hh, ww))
    pos_in = jnp.zeros((batch, num_objects * 3), jnp.float32)
    ges_in = jnp.full((batch, num_objects * gestalt_size), 0.5, jnp.float32)
    pri_in = jnp.zeros((batch, num_objects), jnp.float32)
    pos2, ges2, pri2 = initial_latent_states(
        error, key=k_fwd, num_objects=num_objects, gestalt_size=gestalt_size,
        size=size, level=level, gestalt_mean=gestalt_mean,
        gestalt_std=gestalt_std, std_param=std_param,
        mask=mask_in, position=pos_in, gestalt=ges_in, priority=pri_in)
    jax.block_until_ready((pos2, ges2, pri2))
    assert pos2.shape == pos_s.shape and ges2.shape == ges_s.shape

    print("KERNEL_OK")
</pallas_src>

<mosaic_0001>
module attributes {stable_mosaic.version = 11 : i64} {
  func.func @_fused_kernel(%arg0: i32, %arg1: memref<2x16x8xf32, #tpu.memory_space<vmem>>, %arg2: memref<2x2x40xf32, #tpu.memory_space<vmem>>, %arg3: memref<2x128xf32, #tpu.memory_space<vmem>>, %arg4: memref<1x128xf32, #tpu.memory_space<vmem>>, %arg5: memref<1x128xf32, #tpu.memory_space<vmem>>, %arg6: memref<2x2x4xf32, #tpu.memory_space<vmem>>, %arg7: memref<2x128xf32, #tpu.memory_space<vmem>>) attributes {dimension_semantics = [#tpu.dimension_semantics<arbitrary>], iteration_bounds = array<i64: 1>, scalar_prefetch = 0 : i64, scratch_operands = 0 : i64, tpu.core_type = #tpu.core_type<tc>, window_params = [{pipeline_mode = #tpu.pipeline_mode<synchronous>, transform_indices = @transform_0, window_bounds = array<i64: 2, 16, 8>}, {pipeline_mode = #tpu.pipeline_mode<synchronous>, transform_indices = @transform_1, window_bounds = array<i64: 2, 2, 40>}, {pipeline_mode = #tpu.pipeline_mode<synchronous>, transform_indices = @transform_2, window_bounds = array<i64: 2, 128>}, {pipeline_mode = #tpu.pipeline_mode<synchronous>, transform_indices = @transform_3, window_bounds = array<i64: 1, 128>}, {pipeline_mode = #tpu.pipeline_mode<synchronous>, transform_indices = @transform_4, window_bounds = array<i64: 1, 128>}, {pipeline_mode = #tpu.pipeline_mode<synchronous>, transform_indices = @transform_5, window_bounds = array<i64: 2, 2, 4>}, {pipeline_mode = #tpu.pipeline_mode<synchronous>, transform_indices = @transform_6, window_bounds = array<i64: 2, 128>}]} {
    %0 = tpu.iota {dimensions = array<i32: 1>} : vector<1x16x1xi32>
    %1 = arith.sitofp %0 : vector<1x16x1xi32> to vector<1x16x1xf32>
    %cst = arith.constant 0.13333334 : f32
    %2 = vector.broadcast %cst : f32 to vector<1x16x1xf32>
    %3 = arith.mulf %1, %2 : vector<1x16x1xf32>
    %cst_0 = arith.constant 1.000000e+00 : f32
    %4 = vector.broadcast %cst_0 : f32 to vector<1x16x1xf32>
    %5 = arith.subf %3, %4 : vector<1x16x1xf32>
    %6 = tpu.iota {dimensions = array<i32: 1>} : vector<1x8x1xi32>
    %7 = arith.sitofp %6 : vector<1x8x1xi32> to vector<1x8x1xf32>
    %cst_1 = arith.constant 0.285714298 : f32
    %8 = vector.broadcast %cst_1 : f32 to vector<1x8x1xf32>
    %9 = arith.mulf %7, %8 : vector<1x8x1xf32>
    %cst_2 = arith.constant 1.000000e+00 : f32
    %10 = vector.broadcast %cst_2 : f32 to vector<1x8x1xf32>
    %11 = arith.subf %9, %10 : vector<1x8x1xf32>
    %c0 = arith.constant 0 : index
    %c0_3 = arith.constant 0 : index
    %c0_4 = arith.constant 0 : index
    %12 = vector.load %arg2[%c0, %c0_3, %c0_4] : memref<2x2x40xf32, #tpu.memory_space<vmem>>, vector<2x1x40xf32>
    %c0_5 = arith.constant 0 : index
    %c1 = arith.constant 1 : index
    %c0_6 = arith.constant 0 : index
    %13 = vector.load %arg2[%c0_5, %c1, %c0_6] : memref<2x2x40xf32, #tpu.memory_space<vmem>>, vector<2x1x40xf32>
    %cst_7 = arith.constant -1.000000e+00 : f32
    %cst_8 = arith.constant 1.000000e+00 : f32
    %14 = vector.broadcast %cst_7 : f32 to vector<2x1x40xf32>
    %15 = arith.maximumf %14, %12 : vector<2x1x40xf32>
    %16 = vector.broadcast %cst_8 : f32 to vector<2x1x40xf32>
    %17 = arith.minimumf %16, %15 : vector<2x1x40xf32>
    %cst_9 = arith.constant -1.000000e+00 : f32
    %cst_10 = arith.constant 1.000000e+00 : f32
    %18 = vector.broadcast %cst_9 : f32 to vector<2x1x40xf32>
    %19 = arith.maximumf %18, %13 : vector<2x1x40xf32>
    %20 = vector.broadcast %cst_10 : f32 to vector<2x1x40xf32>
    %21 = arith.minimumf %20, %19 : vector<2x1x40xf32>
    %22 = vector.broadcast %5 : vector<1x16x1xf32> to vector<2x16x40xf32>
    %23 = vector.broadcast %17 : vector<2x1x40xf32> to vector<2x16x40xf32>
    %24 = arith.subf %22, %23 : vector<2x16x40xf32>
    %25 = vector.broadcast %11 : vector<1x8x1xf32> to vector<2x8x40xf32>
    %26 = vector.broadcast %21 : vector<2x1x40xf32> to vector<2x8x40xf32>
    %27 = arith.subf %25, %26 : vector<2x8x40xf32>
    %cst_11 = arith.constant -1.280000e+02 : f32
    %28 = vector.broadcast %cst_11 : f32 to vector<2x16x40xf32>
    %29 = arith.mulf %28, %24 : vector<2x16x40xf32>
    %30 = arith.mulf %29, %24 : vector<2x16x40xf32>
    %31 = math.exp %30 : vector<2x16x40xf32>
    %cst_12 = arith.constant -3.200000e+01 : f32
    %32 = vector.broadcast %cst_12 : f32 to vector<2x8x40xf32>
    %33 = arith.mulf %32, %27 : vector<2x8x40xf32>
    %34 = arith.mulf %33, %27 : vector<2x8x40xf32>
    %35 = math.exp %34 : vector<2x8x40xf32>
    %c0_13 = arith.constant 0 : index
    %c0_14 = arith.constant 0 : index
    %c0_15 = arith.constant 0 : index
    %36 = vector.load %arg1[%c0_13, %c0_14, %c0_15] : memref<2x16x8xf32, #tpu.memory_space<vmem>>, vector<2x16x8xf32>
    "tpu.trace_start"() <{level = 10 : i32, message = "bhw,bwc->bhc"}> : () -> ()
    %cst_16 = arith.constant dense<0.000000e+00> : vector<2x16x40xf32>
    %37 = tpu.matmul %36, %35, %cst_16 {dimension_numbers = #tpu.dot_dimension_numbers<[2], [1], [1], [2], [0, 0, 0, 1, 1, 2], [0], [0]>} : vector<2x16x8xf32>, vector<2x8x40xf32>, vector<2x16x40xf32> -> vector<2x16x40xf32>
    "tpu.trace_stop"() : () -> ()
    %38 = arith.mulf %31, %37 : vector<2x16x40xf32>
    %cst_17 = arith.constant dense<0.000000e+00> : vector<2x40xf32>
    %39 = vector.multi_reduction <add>, %38, %cst_17 [1] : vector<2x16x40xf32> to vector<2x40xf32>
    %40 = vector.shape_cast %39 : vector<2x40xf32> to vector<2x1x40xf32>
    %41 = tpu.iota {dimensions = array<i32: 2>} : vector<1x4x40xi32>
    %42 = tpu.iota {dimensions = array<i32: 1>} : vector<1x4x40xi32>
    %c10_i32 = arith.constant 10 : i32
    %43 = vector.broadcast %c10_i32 : i32 to vector<1x4x40xi32>
    %44 = arith.muli %42, %43 : vector<1x4x40xi32>
    %45 = arith.cmpi sge, %41, %44 : vector<1x4x40xi32>
    %c1_i32 = arith.constant 1 : i32
    %46 = vector.broadcast %c1_i32 : i32 to vector<1x4x40xi32>
    %47 = arith.addi %42, %46 : vector<1x4x40xi32>
    %c10_i32_18 = arith.constant 10 : i32
    %48 = vector.broadcast %c10_i32_18 : i32 to vector<1x4x40xi32>
    %49 = arith.muli %47, %48 : vector<1x4x40xi32>
    %50 = arith.cmpi slt, %41, %49 : vector<1x4x40xi32>
    %51 = arith.andi %45, %50 : vector<1x4x40xi1>
    %cst_19 = arith.constant 0xFF800000 : f32
    %52 = vector.shape_cast %51 : vector<1x4x40xi1> to vector<1x4x40xi1>
    %53 = vector.broadcast %52 : vector<1x4x40xi1> to vector<2x4x40xi1>
    %54 = vector.shape_cast %40 : vector<2x1x40xf32> to vector<2x1x40xf32>
    %55 = vector.broadcast %54 : vector<2x1x40xf32> to vector<2x4x40xf32>
    %56 = vector.broadcast %cst_19 : f32 to vector<2x4x40xf32>
    %57 = arith.select %53, %55, %56 : vector<2x4x40xi1>, vector<2x4x40xf32>
    %cst_20 = arith.constant dense<0xFF800000> : vector<2x4xf32>
    %58 = vector.multi_reduction <maximumf>, %57, %cst_20 [2] : vector<2x4x40xf32> to vector<2x4xf32>
    %59 = vector.shape_cast %58 : vector<2x4xf32> to vector<2x4x1xf32>
    %60 = vector.broadcast %59 : vector<2x4x1xf32> to vector<2x4x40xf32>
    %61 = arith.cmpf oeq, %57, %60 : vector<2x4x40xf32>
    %c40_i32 = arith.constant 40 : i32
    %62 = vector.shape_cast %41 : vector<1x4x40xi32> to vector<1x4x40xi32>
    %63 = vector.broadcast %62 : vector<1x4x40xi32> to vector<2x4x40xi32>
    %64 = vector.broadcast %c40_i32 : i32 to vector<2x4x40xi32>
    %65 = arith.select %61, %63, %64 : vector<2x4x40xi1>, vector<2x4x40xi32>
    %cst_21 = arith.constant dense<2147483647> : vector<2x4xi32>
    %66 = vector.multi_reduction <minsi>, %65, %cst_21 [2] : vector<2x4x40xi32> to vector<2x4xi32>
    %67 = vector.shape_cast %66 : vector<2x4xi32> to vector<2x4x1xi32>
    %68 = vector.broadcast %41 : vector<1x4x40xi32> to vector<2x4x40xi32>
    %69 = vector.broadcast %67 : vector<2x4x1xi32> to vector<2x4x40xi32>
    %70 = arith.cmpi eq, %68, %69 : vector<2x4x40xi32>
    %71 = arith.extui %70 : vector<2x4x40xi1> to vector<2x4x40xi32>
    %72 = arith.sitofp %71 : vector<2x4x40xi32> to vector<2x4x40xf32>
    %73 = vector.broadcast %12 : vector<2x1x40xf32> to vector<2x4x40xf32>
    %74 = arith.mulf %72, %73 : vector<2x4x40xf32>
    %cst_22 = arith.constant dense<0.000000e+00> : vector<2x4xf32>
    %75 = vector.multi_reduction <add>, %74, %cst_22 [2] : vector<2x4x40xf32> to vector<2x4xf32>
    %c0_23 = arith.constant 0 : index
    %c0_24 = arith.constant 0 : index
    %c0_25 = arith.constant 0 : index
    %76 = vector.load %arg6[%c0_23, %c0_24, %c0_25] : memref<2x2x4xf32, #tpu.memory_space<vmem>>, vector<1x2x4xf32>
    %77 = vector.shape_cast %76 : vector<1x2x4xf32> to vector<2x4xf32>
    %78 = vector.shape_cast %75 : vector<2x4xf32> to vector<1x2x4xf32>
    tpu.vector_store %arg6[%c0_23, %c0_24, %c0_25], %78 {strides = array<i32>} : memref<2x2x4xf32, #tpu.memory_space<vmem>>, vector<1x2x4xf32>,
    %79 = vector.broadcast %13 : vector<2x1x40xf32> to vector<2x4x40xf32>
    %80 = arith.mulf %72, %79 : vector<2x4x40xf32>
    %cst_26 = arith.constant dense<0.000000e+00> : vector<2x4xf32>
    %81 = vector.multi_reduction <add>, %80, %cst_26 [2] : vector<2x4x40xf32> to vector<2x4xf32>
    %c1_27 = arith.constant 1 : index
    %c0_28 = arith.constant 0 : index
    %c0_29 = arith.constant 0 : index
    %82 = vector.load %arg6[%c1_27, %c0_28, %c0_29] : memref<2x2x4xf32, #tpu.memory_space<vmem>>, vector<1x2x4xf32>
    %83 = vector.shape_cast %82 : vector<1x2x4xf32> to vector<2x4xf32>
    %84 = vector.shape_cast %81 : vector<2x4xf32> to vector<1x2x4xf32>
    tpu.vector_store %arg6[%c1_27, %c0_28, %c0_29], %84 {strides = array<i32>} : memref<2x2x4xf32, #tpu.memory_space<vmem>>, vector<1x2x4xf32>,
    %c0_30 = arith.constant 0 : index
    %c0_31 = arith.constant 0 : index
    %85 = vector.load %arg3[%c0_30, %c0_31] : memref<2x128xf32, #tpu.memory_space<vmem>>, vector<2x128xf32>
    %c0_32 = arith.constant 0 : index
    %c0_33 = arith.constant 0 : index
    %86 = vector.load %arg5[%c0_32, %c0_33] : memref<1x128xf32, #tpu.memory_space<vmem>>, vector<1x128xf32>
    %87 = vector.broadcast %86 : vector<1x128xf32> to vector<2x128xf32>
    %88 = arith.mulf %85, %87 : vector<2x128xf32>
    %c0_34 = arith.constant 0 : index
    %c0_35 = arith.constant 0 : index
    %89 = vector.load %arg4[%c0_34, %c0_35] : memref<1x128xf32, #tpu.memory_space<vmem>>, vector<1x128xf32>
    %90 = vector.broadcast %89 : vector<1x128xf32> to vector<2x128xf32>
    %91 = arith.addf %88, %90 : vector<2x128xf32>
    %cst_36 = arith.constant 0.000000e+00 : f32
    %92 = vector.broadcast %cst_36 : f32 to vector<2x128xf32>
    %93 = arith.subf %92, %91 : vector<2x128xf32>
    %94 = math.exp %93 : vector<2x128xf32>
    %cst_37 = arith.constant 1.000000e+00 : f32
    %95 = vector.broadcast %cst_37 : f32 to vector<2x128xf32>
    %96 = arith.addf %95, %94 : vector<2x128xf32>
    %cst_38 = arith.constant 1.000000e+00 : f32
    %97 = vector.broadcast %cst_38 : f32 to vector<2x128xf32>
    %98 = arith.divf %97, %96 : vector<2x128xf32>
    %c0_39 = arith.constant 0 : index
    %c0_40 = arith.constant 0 : index
    %99 = vector.load %arg7[%c0_39, %c0_40] : memref<2x128xf32, #tpu.memory_space<vmem>>, vector<2x128xf32>
    tpu.vector_store %arg7[%c0_39, %c0_40], %98 {strides = array<i32>} : memref<2x128xf32, #tpu.memory_space<vmem>>, vector<2x128xf32>,
    return
  }
  func.func @transform_0(%arg0: i32) -> (i32, i32, i32) {
    %c0_i32 = arith.constant 0 : i32
    %c0_i32_0 = arith.constant 0 : i32
    %c0_i32_1 = arith.constant 0 : i32
    %c0_i32_2 = arith.constant 0 : i32
    return %c0_i32, %c0_i32_0, %c0_i32_1 : i32, i32, i32
  }
  func.func @transform_1(%arg0: i32) -> (i32, i32, i32) {
    %c0_i32 = arith.constant 0 : i32
    %c0_i32_0 = arith.constant 0 : i32
    %c0_i32_1 = arith.constant 0 : i32
    %c0_i32_2 = arith.constant 0 : i32
    return %c0_i32, %c0_i32_0, %c0_i32_1 : i32, i32, i32
  }
  func.func @transform_2(%arg0: i32) -> (i32, i32) {
    %c0_i32 = arith.constant 0 : i32
    %c0_i32_0 = arith.constant 0 : i32
    %c0_i32_1 = arith.constant 0 : i32
    return %c0_i32, %c0_i32_0 : i32, i32
  }
  func.func @transform_3(%arg0: i32) -> (i32, i32) {
    %c0_i32 = arith.constant 0 : i32
    %c0_i32_0 = arith.constant 0 : i32
    %c0_i32_1 = arith.constant 0 : i32
    return %c0_i32, %c0_i32_0 : i32, i32
  }
  func.func @transform_4(%arg0: i32) -> (i32, i32) {
    %c0_i32 = arith.constant 0 : i32
    %c0_i32_0 = arith.constant 0 : i32
    %c0_i32_1 = arith.constant 0 : i32
    return %c0_i32, %c0_i32_0 : i32, i32
  }
  func.func @transform_5(%arg0: i32) -> (i32, i32, i32) {
    %c0_i32 = arith.constant 0 : i32
    %c0_i32_0 = arith.constant 0 : i32
    %c0_i32_1 = arith.constant 0 : i32
    %c0_i32_2 = arith.constant 0 : i32
    return %c0_i32, %c0_i32_0, %c0_i32_1 : i32, i32, i32
  }
  func.func @transform_6(%arg0: i32) -> (i32, i32) {
    %c0_i32 = arith.constant 0 : i32
    %c0_i32_0 = arith.constant 0 : i32
    %c0_i32_1 = arith.constant 0 : i32
    return %c0_i32, %c0_i32_0 : i32, i32
  }
}

</mosaic_0001>

<llo_original>
// kernel: tpu_custom_call.1
$region0: #{tpu_custom_call.1}
  #allocation0 [shape = 'u32[]', space=smem, size = 0x4, offset = 0x4, fixed_abs, tag = 'smem constant byte address 0x4 - core index']
  #allocation1 [shape = 'u32[144,128]{1,0:T(1,128)}', space=vmem, size = 0x12000, scoped, tag = 'internal scratch']
  %s0 = inlined_call_operand.vmem [shape: f32[2,16,8], index: 0, kind: input, shape index: {}]
  %s1 = inlined_call_operand.vmem [shape: f32[2,2,40], index: 1, kind: input, shape index: {}]
  %s2 = inlined_call_operand.vmem [shape: f32[2,128], index: 2, kind: input, shape index: {}]
  %s3 = inlined_call_operand.vmem [shape: f32[1,128], index: 3, kind: input, shape index: {}]
  %s4 = inlined_call_operand.vmem [shape: f32[1,128], index: 4, kind: input, shape index: {}]
  %s5 = inlined_call_operand.hbm [shape: f32[2,2,4], index: 5, kind: output, shape index: {0}]
  %s6 = inlined_call_operand.hbm [shape: f32[2,128], index: 6, kind: output, shape index: {1}]
  %7 = xla_tuple %s5, %s6
  %s8 = sld [smem:[#allocation0]]
  $region38: #{tpu_custom_call.1} parent=0
    _
  %s10 = ssub.s32 1, %s8
  %s11 = scalar_select 0, %s10, %s8
  $region1: #{tpu_custom_call.1} parent=0
    #allocation2 [shape = 'u8[2048]{0}', space=vmem, size = 0x800, scoped, tag = 'output window, operand 0, single buffered']
    #allocation3 [shape = 's32[1]{0}', space=sflag, size = 0x4, scoped, tag = 'scoped memory for tpu_custom_call.1']
    #allocation4 [shape = 'u8[1024]{0}', space=vmem, size = 0x400, scoped, tag = 'output window, operand 1, single buffered']
    #allocation5 [shape = 's32[1]{0}', space=sflag, size = 0x4, scoped, tag = 'scoped memory for tpu_custom_call.1']
    %12 = vsyncpa [#allocation3], 0
    %13 = vsyncpa [#allocation5], 0
    // Predicated region
    $region2: #{tpu_custom_call.1} parent=1 // pred_check
      _
    $region3: #{tpu_custom_call.1} parent=1 // pred_check_branch
      %15 = sbr.rel (0) target = $region5
    $region4: #{tpu_custom_call.1} parent=1 // pred_region
      _
    $region5: #{tpu_custom_call.1} parent=1 // pred_fallthru
      _
    // Predicated region
    $region6: #{tpu_custom_call.1} parent=1 // pred_check
      _
    $region7: #{tpu_custom_call.1} parent=1 // pred_check_branch
      %17 = sbr.rel (0) target = $region9
    $region8: #{tpu_custom_call.1} parent=1 // pred_region
      _
    $region9: #{tpu_custom_call.1} parent=1 // pred_fallthru
      _
    // Predicated region
    $region10: #{tpu_custom_call.1} parent=1 // pred_check
      _
    $region11: #{tpu_custom_call.1} parent=1 // pred_check_branch
      %19 = sbr.rel (0) target = $region13
    $region12: #{tpu_custom_call.1} parent=1 // pred_region
      _
    $region13: #{tpu_custom_call.1} parent=1 // pred_fallthru
      _
    // Predicated region
    $region14: #{tpu_custom_call.1} parent=1 // pred_check
      _
    $region15: #{tpu_custom_call.1} parent=1 // pred_check_branch
      %21 = sbr.rel (0) target = $region17
    $region16: #{tpu_custom_call.1} parent=1 // pred_region
      _
    $region17: #{tpu_custom_call.1} parent=1 // pred_fallthru
      _
    // Predicated region
    $region18: #{tpu_custom_call.1} parent=1 // pred_check
      _
    $region19: #{tpu_custom_call.1} parent=1 // pred_check_branch
      %23 = sbr.rel (0) target = $region21
    $region20: #{tpu_custom_call.1} parent=1 // pred_region
      _
    $region21: #{tpu_custom_call.1} parent=1 // pred_fallthru
      _
    %v24 = vlaneseq
    %v25 = vshrl.u32 %v24, 7
    %v26 = vadd.s32 %v25, 8
    %v27 = vcvt.s32.f32 %v25
    %v28 = vcvt.s32.f32 %v26
    %v29 = vmul.f32 %v27, 0.13333334
    %v30 = vmul.f32 %v28, 0.13333334
    %v31 = vsub.f32 %v29, 1.0
    %v32 = vsub.f32 %v30, 1.0
    %v33 = vmul.f32 %v27, 0.2857143
    %v34 = vsub.f32 %v33, 1.0
    %v35 = vld [vmem:[%s1] sm:$0x1]
    %v36 = vld [vmem:[%s1 + $0x2] sm:$0x1]
    %v37 = vld [vmem:[%s1 + $0x1] sm:$0x1]
    %v38 = vld [vmem:[%s1 + $0x3] sm:$0x1]
    %v39 = vmax.f32 %v35, -1.0
    %v40 = vmax.f32 %v36, -1.0
    %v41 = vmin.f32 %v39, 1.0
    %v42 = vmin.f32 %v40, 1.0
    %v43 = vmax.f32 %v37, -1.0
    %v44 = vmax.f32 %v38, -1.0
    %v45 = vmin.f32 %v43, 1.0
    %v46 = vmin.f32 %v44, 1.0
    %v47 = vlaneseq
    %v48 = vshrl.u32 %v47, 7
    %v49 = vsub.s32 0, %v48
    %v50 = vrot.slane %v41, %v49
    %v51 = vlaneseq
    %v52 = vshrl.u32 %v51, 7
    %v53 = vsub.s32 0, %v52
    %v54 = vrot.slane %v42, %v53
    %v55 = vsub.f32 %v31, %v50
    %v56 = vsub.f32 %v32, %v50
    %v57 = vsub.f32 %v31, %v54
    %v58 = vsub.f32 %v32, %v54
    %v59 = vlaneseq
    %v60 = vshrl.u32 %v59, 7
    %v61 = vsub.s32 0, %v60
    %v62 = vrot.slane %v45, %v61
    %v63 = vlaneseq
    %v64 = vshrl.u32 %v63, 7
    %v65 = vsub.s32 0, %v64
    %v66 = vrot.slane %v46, %v65
    %v67 = vsub.f32 %v34, %v62
    %v68 = vsub.f32 %v34, %v66
    %v69 = vmul.f32 %v55, -128.0
    %v70 = vmul.f32 %v56, -128.0
    %v71 = vmul.f32 %v57, -128.0
    %v72 = vmul.f32 %v58, -128.0
    %v73 = vmul.f32 %v69, %v55
    %v74 = vmul.f32 %v70, %v56
    %v75 = vmul.f32 %v71, %v57
    %v76 = vmul.f32 %v72, %v58
    %v77 = vmul.f32 %v73, 1.442695
    %v78 = vpow.pop %v77
    %v79 = vmul.f32 %v74, 1.442695
    %v80 = vpow.pop %v79
    %v81 = vmul.f32 %v75, 1.442695
    %v82 = vpow.pop %v81
    %v83 = vmul.f32 %v76, 1.442695
    %v84 = vpow.pop %v83
    %v85 = vmul.f32 %v67, -32.0
    %v86 = vmul.f32 %v68, -32.0
    %v87 = vmul.f32 %v85, %v67
    %v88 = vmul.f32 %v86, %v68
    %v89 = vmul.f32 %v87, 1.442695
    %v90 = vpow.pop %v89
    %v91 = vmul.f32 %v88, 1.442695
    %v92 = vpow.pop %v91
    %v93 = vld [vmem:[%s0] sm:$0xff]
    %v94 = vld [vmem:[%s0 + $0x8] sm:$0xff]
    %v95 = vld [vmem:[%s0 + $0x10] sm:$0xff]
    %v96 = vld [vmem:[%s0 + $0x18] sm:$0xff]
    %vm97 = vcmask 64512
    %v99 = vsel %vm97, %v93, 0
    %v102 = vsel %vm97, %v94, 0
    %104 = vmatprep.subr.mxu0 0.0
    %105 = vmatpush1.msra.mxu0 %v90
    %106 = vmatprep.subr.mxu0 0.0
    %107 = vmatpush1.msra.mxu0 0.0
    %108 = vmatprep.subr.mxu0 0.0
    %109 = vmatpush1.msra.mxu0 0.0
    %110 = vmatprep.subr.mxu0 0.0
    %111 = vmatpush1.msra.mxu0 0.0
    %112 = vmatprep.subr.mxu0 0.0
    %113 = vmatpush1.msra.mxu0 0.0
    %114 = vmatprep.subr.mxu0 0.0
    %115 = vmatpush1.msra.mxu0 0.0
    %116 = vmatprep.subr.mxu0 0.0
    %117 = vmatpush1.msra.mxu0 0.0
    %118 = vmatprep.subr.mxu0 0.0
    %119 = vmatpush1.msra.mxu0 0.0
    %120 = vmatprep.subr.mxu0 0.0
    %121 = vmatpush1.msra.mxu0 0.0
    %122 = vmatprep.subr.mxu0 0.0
    %123 = vmatpush1.msra.mxu0 0.0
    %124 = vmatprep.subr.mxu0 0.0
    %125 = vmatpush1.msra.mxu0 0.0
    %126 = vmatprep.subr.mxu0 0.0
    %127 = vmatpush1.msra.mxu0 0.0
    %128 = vmatprep.subr.mxu0 0.0
    %129 = vmatpush1.msra.mxu0 0.0
    %130 = vmatprep.subr.mxu0 0.0
    %131 = vmatpush1.msra.mxu0 0.0
    %132 = vmatprep.subr.mxu0 0.0
    %133 = vmatpush1.msra.mxu0 0.0
    %134 = vmatprep.subr.mxu0 0.0
    %135 = vmatpush1.msra.mxu0 0.0
    %136 = vmatprep.subr.mxu0 0.0
    %137 = vmatpush1.msra.mxu0 0.0
    %138 = vmatprep.subr.mxu0 0.0
    %139 = vmatpush1.msra.mxu0 0.0
    %140 = vmatprep.subr.mxu0 0.0
    %141 = vmatpush1.msra.mxu0 0.0
    %142 = vmatprep.subr.mxu0 0.0
    %143 = vmatpush1.msra.mxu0 0.0
    %144 = vmatprep.subr.mxu0 0.0
    %145 = vmatpush1.msra.mxu0 0.0
    %146 = vmatprep.subr.mxu0 0.0
    %147 = vmatpush1.msra.mxu0 0.0
    %148 = vmatprep.subr.mxu0 0.0
    %149 = vmatpush1.msra.mxu0 0.0
    %150 = vmatprep.subr.mxu0 0.0
    %151 = vmatpush1.msra.mxu0 0.0
    %152 = vmatprep.subr.mxu0 0.0
    %153 = vmatpush1.msra.mxu0 0.0
    %154 = vmatprep.subr.mxu0 0.0
    %155 = vmatpush1.msra.mxu0 0.0
    %156 = vmatprep.subr.mxu0 0.0
    %157 = vmatpush1.msra.mxu0 0.0
    %158 = vmatprep.subr.mxu0 0.0
    %159 = vmatpush1.msra.mxu0 0.0
    %160 = vmatprep.subr.mxu0 0.0
    %161 = vmatpush1.msra.mxu0 0.0
    %162 = vmatprep.subr.mxu0 0.0
    %163 = vmatpush1.msra.mxu0 0.0
    %164 = vmatprep.subr.mxu0 0.0
    %165 = vmatpush1.msra.mxu0 0.0
    %166 = vmatprep.subr.mxu0 0.0
    %167 = vmatpush1.msra.mxu0 0.0
    %168 = vmatprep.mubr.f32.mxu0 0.0
    %169 = vmatmul.mubr.f32.gmra.mrb[0].mxu0 %v99
    %v170 = vpop.f32.mrb[0].mxu0
    %v171 = vadd.f32 0.0, %v170
    %v172 = vpop.f32.mrb[0].mxu0
    %173 = vmatprep.mubr.f32.mxu0 0.0
    %174 = vmatmul.mubr.f32.gmra.mrb[0].mxu0 %v102
    %v175 = vpop.f32.mrb[0].mxu0
    %v176 = vadd.f32 0.0, %v175
    %v177 = vpop.f32.mrb[0].mxu0
    %178 = vdwg.mxu0
    %v180 = vsel %vm97, %v95, 0
    %v183 = vsel %vm97, %v96, 0
    %185 = vmatprep.subr.mxu0 0.0
    %186 = vmatpush1.msra.mxu0 %v92
    %187 = vmatprep.subr.mxu0 0.0
    %188 = vmatpush1.msra.mxu0 0.0
    %189 = vmatprep.subr.mxu0 0.0
    %190 = vmatpush1.msra.mxu0 0.0
    %191 = vmatprep.subr.mxu0 0.0
    %192 = vmatpush1.msra.mxu0 0.0
    %193 = vmatprep.subr.mxu0 0.0
    %194 = vmatpush1.msra.mxu0 0.0
    %195 = vmatprep.subr.mxu0 0.0
    %196 = vmatpush1.msra.mxu0 0.0
    %197 = vmatprep.subr.mxu0 0.0
    %198 = vmatpush1.msra.mxu0 0.0
    %199 = vmatprep.subr.mxu0 0.0
    %200 = vmatpush1.msra.mxu0 0.0
    %201 = vmatprep.subr.mxu0 0.0
    %202 = vmatpush1.msra.mxu0 0.0
    %203 = vmatprep.subr.mxu0 0.0
    %204 = vmatpush1.msra.mxu0 0.0
    %205 = vmatprep.subr.mxu0 0.0
    %206 = vmatpush1.msra.mxu0 0.0
    %207 = vmatprep.subr.mxu0 0.0
    %208 = vmatpush1.msra.mxu0 0.0
    %209 = vmatprep.subr.mxu0 0.0
    %210 = vmatpush1.msra.mxu0 0.0
    %211 = vmatprep.subr.mxu0 0.0
    %212 = vmatpush1.msra.mxu0 0.0
    %213 = vmatprep.subr.mxu0 0.0
    %214 = vmatpush1.msra.mxu0 0.0
    %215 = vmatprep.subr.mxu0 0.0
    %216 = vmatpush1.msra.mxu0 0.0
    %217 = vmatprep.subr.mxu0 0.0
    %218 = vmatpush1.msra.mxu0 0.0
    %219 = vmatprep.subr.mxu0 0.0
    %220 = vmatpush1.msra.mxu0 0.0
    %221 = vmatprep.subr.mxu0 0.0
    %222 = vmatpush1.msra.mxu0 0.0
    %223 = vmatprep.subr.mxu0 0.0
    %224 = vmatpush1.msra.mxu0 0.0
    %225 = vmatprep.subr.mxu0 0.0
    %226 = vmatpush1.msra.mxu0 0.0
    %227 = vmatprep.subr.mxu0 0.0
    %228 = vmatpush1.msra.mxu0 0.0
    %229 = vmatprep.subr.mxu0 0.0
    %230 = vmatpush1.msra.mxu0 0.0
    %231 = vmatprep.subr.mxu0 0.0
    %232 = vmatpush1.msra.mxu0 0.0
    %233 = vmatprep.subr.mxu0 0.0
    %234 = vmatpush1.msra.mxu0 0.0
    %235 = vmatprep.subr.mxu0 0.0
    %236 = vmatpush1.msra.mxu0 0.0
    %237 = vmatprep.subr.mxu0 0.0
    %238 = vmatpush1.msra.mxu0 0.0
    %239 = vmatprep.subr.mxu0 0.0
    %240 = vmatpush1.msra.mxu0 0.0
    %241 = vmatprep.subr.mxu0 0.0
    %242 = vmatpush1.msra.mxu0 0.0
    %243 = vmatprep.subr.mxu0 0.0
    %244 = vmatpush1.msra.mxu0 0.0
    %245 = vmatprep.subr.mxu0 0.0
    %246 = vmatpush1.msra.mxu0 0.0
    %247 = vmatprep.subr.mxu0 0.0
    %248 = vmatpush1.msra.mxu0 0.0
    %249 = vmatprep.mubr.f32.mxu0 0.0
    %250 = vmatmul.mubr.f32.gmra.mrb[0].mxu0 %v180
    %v251 = vpop.f32.mrb[0].mxu0
    %v252 = vadd.f32 0.0, %v251
    %v253 = vpop.f32.mrb[0].mxu0
    %254 = vmatprep.mubr.f32.mxu0 0.0
    %255 = vmatmul.mubr.f32.gmra.mrb[0].mxu0 %v183
    %v256 = vpop.f32.mrb[0].mxu0
    %v257 = vadd.f32 0.0, %v256
    %v258 = vpop.f32.mrb[0].mxu0
    %259 = vdwg.mxu0
    %v260 = vmul.f32 %v78, %v171
    %v261 = vmul.f32 %v80, %v176
    %v262 = vmul.f32 %v82, %v252
    %v263 = vmul.f32 %v84, %v257
    %vm264 = vcmask 326656
    %v265 = vsel %vm264, %v260, 0.0
    %v266 = vsel %vm264, %v261, 0.0
    %v267 = vadd.f32 %v265, %v266
    %v268 = vrot.slane %v267, 4
    %v269 = vadd.f32 %v267, %v268
    %v270 = vrot.slane %v269, 2
    %v271 = vadd.f32 %v269, %v270
    %v272 = vrot.slane %v271, 1
    %v273 = vadd.f32 %v271, %v272
    %v274 = vsel %vm264, %v262, 0.0
    %v275 = vsel %vm264, %v263, 0.0
    %v276 = vadd.f32 %v274, %v275
    %v277 = vrot.slane %v276, 4
    %v278 = vadd.f32 %v276, %v277
    %v279 = vrot.slane %v278, 2
    %v280 = vadd.f32 %v278, %v279
    %v281 = vrot.slane %v280, 1
    %v282 = vadd.f32 %v280, %v281
    %v283 = vlaneseq
    %v284 = vand.u32 %v283, 127
    %v285 = vmul.u32 %v25, 10
    %vm286 = vcmp.ge.s32.totalorder %v284, %v285
    %v287 = vadd.s32 %v25, 1
    %v288 = vmul.u32 %v287, 10
    %vm289 = vcmp.lt.s32.totalorder %v284, %v288
    %vm290 = vmand %vm286, %vm289
    %v291 = vsel %vm290, 1, 0
    %vm292 = vcmp.eq.s32.totalorder %v291, 1
    %v293 = vsel %vm292, %v273, -inf
    %v294 = vsel %vm292, %v282, -inf
    %vm295 = vcmask 322560
    %v296 = vsel %vm295, %v293, -inf
    %297 = vmax.xlane.f32.xlu0 %v296
    %v298 = vpop.xlane.xlu0 %297
    %v299 = vsel %vm295, %v294, -inf
    %300 = vmax.xlane.f32.xlu0 %v299
    %v301 = vpop.xlane.xlu0 %300
    %vm302 = vcmp.eq.f32.partialorder %v293, %v298
    %vm303 = vcmp.eq.f32.partialorder %v294, %v301
    %v304 = vsel %vm302, %v284, 40
    %v305 = vsel %vm303, %v284, 40
    %v306 = vsel %vm295, %v304, 2147483647
    %v307 = vand.u32 %v306, 65535
    %v308 = vshra.s32 %v306, 16
    %v309 = vcvt.s32.f32 %v307
    %v310 = vcvt.s32.f32 %v308
    %311 = vmin.xlane.f32.xlu0 %v310
    %v312 = vpop.xlane.xlu0 %311
    %vm313 = vcmp.eq.f32.partialorder %v310, %v312
    %v314 = vsel %vm313, %v309, inf
    %315 = vmin.xlane.f32.xlu0 %v314
    %v316 = vpop.xlane.xlu0 %315
    %v317 = vcvt.f32.s32 %v316
    %v318 = vcvt.f32.s32 %v312
    %v319 = vshll.u32 %v318, 16
    %v320 = vadd.s32 %v319, %v317
    %v321 = vsel %vm295, %v305, 2147483647
    %v322 = vand.u32 %v321, 65535
    %v323 = vshra.s32 %v321, 16
    %v324 = vcvt.s32.f32 %v322
    %v325 = vcvt.s32.f32 %v323
    %326 = vmin.xlane.f32.xlu0 %v325
    %v327 = vpop.xlane.xlu0 %326
    %vm328 = vcmp.eq.f32.partialorder %v325, %v327
    %v329 = vsel %vm328, %v324, inf
    %330 = vmin.xlane.f32.xlu0 %v329
    %v331 = vpop.xlane.xlu0 %330
    %v332 = vcvt.f32.s32 %v331
    %v333 = vcvt.f32.s32 %v327
    %v334 = vshll.u32 %v333, 16
    %v335 = vadd.s32 %v334, %v332
    %vm336 = vcmp.eq.s32.totalorder %v284, %v320
    %vm337 = vcmp.eq.s32.totalorder %v284, %v335
    %v338 = vsel %vm336, 1, 0
    %v339 = vsel %vm337, 1, 0
    %v340 = vcvt.s32.f32 %v338
    %v341 = vcvt.s32.f32 %v339
    %v342 = vlaneseq
    %v343 = vshrl.u32 %v342, 7
    %v344 = vsub.s32 0, %v343
    %v345 = vrot.slane %v35, %v344
    %v346 = vlaneseq
    %v347 = vshrl.u32 %v346, 7
    %v348 = vsub.s32 0, %v347
    %v349 = vrot.slane %v36, %v348
    %v350 = vmul.f32 %v340, %v345
    %v351 = vmul.f32 %v341, %v349
    %v352 = vsel %vm295, %v350, 0.0
    %353 = vadd.xlane.f32.xlu0 %v352
    %v354 = vpop.xlane.xlu0 %353
    %v355 = vsel %vm295, %v351, 0.0
    %356 = vadd.xlane.f32.xlu0 %v355
    %v357 = vpop.xlane.xlu0 %356
    %v360 = vlaneseq
    %v361 = vshrl.u32 %v360, 7
    %v362 = vsub.s32 %v284, %v361
    %v363 = vrot.slane %v354, %v362
    %v364 = vlaneseq
    %v365 = vshrl.u32 %v364, 7
    %v366 = vsub.s32 %v284, %v365
    %v367 = vrot.slane %v357, %v366
    %vm368 = vcmask 1041409
    %v369 = vsel %vm368, %v367, %v363
    %vm371 = vcmask 25600
    %372 = vst.msk [vmem:[#allocation2] sm:$0x3] %vm371, %v369
    %v373 = vlaneseq
    %v374 = vshrl.u32 %v373, 7
    %v375 = vsub.s32 0, %v374
    %v376 = vrot.slane %v37, %v375
    %v377 = vlaneseq
    %v378 = vshrl.u32 %v377, 7
    %v379 = vsub.s32 0, %v378
    %v380 = vrot.slane %v38, %v379
    %v381 = vmul.f32 %v340, %v376
    %v382 = vmul.f32 %v341, %v380
    %v383 = vsel %vm295, %v381, 0.0
    %384 = vadd.xlane.f32.xlu0 %v383
    %v385 = vpop.xlane.xlu0 %384
    %v386 = vsel %vm295, %v382, 0.0
    %387 = vadd.xlane.f32.xlu0 %v386
    %v388 = vpop.xlane.xlu0 %387
    %v391 = vlaneseq
    %v392 = vshrl.u32 %v391, 7
    %v393 = vsub.s32 %v284, %v392
    %v394 = vrot.slane %v385, %v393
    %v395 = vlaneseq
    %v396 = vshrl.u32 %v395, 7
    %v397 = vsub.s32 %v284, %v396
    %v398 = vrot.slane %v388, %v397
    %v399 = vsel %vm368, %v398, %v394
    %s401 = scalar_lea.vmem [#allocation2], 2
    %402 = vst.msk [vmem:[%s401] sm:$0x3] %vm371, %v399
    %v403 = vld [vmem:[%s2] sm:$0x3]
    %v404 = vld [vmem:[%s4] sm:$0x1]
    %v406 = vlaneseq
    %v407 = vshrl.u32 %v406, 7
    %v408 = vsub.s32 0, %v407
    %v409 = vrot.slane %v404, %v408
    %v411 = vmul.f32 %v403, %v409
    %v412 = vld [vmem:[%s3] sm:$0x1]
    %v414 = vlaneseq
    %v415 = vshrl.u32 %v414, 7
    %v416 = vsub.s32 0, %v415
    %v417 = vrot.slane %v412, %v416
    %v419 = vadd.f32 %v411, %v417
    %v420 = vsub.f32 0.0, %v419
    %v421 = vmul.f32 %v420, 1.442695
    %v422 = vpow.pop %v421
    %v423 = vadd.f32 %v422, 1.0
    %v424 = vrcp.pop %v423
    %v425 = vmul.f32 1.0, %v424
    %426 = vst [vmem:[#allocation4] sm:$0x3] %v425
    // Predicated region
    $region22: #{tpu_custom_call.1} parent=1 // pred_check
      _
    $region23: #{tpu_custom_call.1} parent=1 // pred_check_branch
      %428 = sbr.rel (0) target = $region25
    $region24: #{tpu_custom_call.1} parent=1 // pred_region
      %s430 = ssub.s32 64, 64
      %431 = vsyncadd [#allocation3], %s430
      %s432 = sshll.u32 [#allocation2], 4
      %s433 = int_to_ptr.vmem [resolvable:$true] %s432
      %438 = dma.vmem_to_hbm [thread:$0]  %s433, 64, %s5, [#allocation3], 32, 32, 2
    $region25: #{tpu_custom_call.1} parent=1 // pred_fallthru
      _
    // Predicated region
    $region26: #{tpu_custom_call.1} parent=1 // pred_check
      _
    $region27: #{tpu_custom_call.1} parent=1 // pred_check_branch
      %440 = sbr.rel (0) target = $region29
    $region28: #{tpu_custom_call.1} parent=1 // pred_region
      %s442 = ssub.s32 32, 32
      %443 = vsyncadd [#allocation5], %s442
      %s445 = sshll.u32 [#allocation4], 4
      %s446 = int_to_ptr.vmem [resolvable:$true] %s445
      %448 = dma.vmem_to_hbm [thread:$0]  %s446, 32, %s6, [#allocation5]
    $region29: #{tpu_custom_call.1} parent=1 // pred_fallthru
      _
    // Predicated region
    $region30: #{tpu_custom_call.1} parent=1 // pred_check
      _
    $region31: #{tpu_custom_call.1} parent=1 // pred_check_branch
      %450 = sbr.rel (0) target = $region33
    $region32: #{tpu_custom_call.1} parent=1 // pred_region
      %451 = dma.done [#allocation3], 64
    $region33: #{tpu_custom_call.1} parent=1 // pred_fallthru
      _
    // Predicated region
    $region34: #{tpu_custom_call.1} parent=1 // pred_check
      _
    $region35: #{tpu_custom_call.1} parent=1 // pred_check_branch
      %453 = sbr.rel (0) target = $region37
    $region36: #{tpu_custom_call.1} parent=1 // pred_region
      %454 = dma.done [#allocation5], 32
    $region37: #{tpu_custom_call.1} parent=1 // pred_fallthru
      _
    %455 = vsyncpa [#allocation3], 1
    %456 = vsyncpa [#allocation5], 1

</llo_original>
